<compile_context>
chip_gen: v6e
topology: v6e:2x2x1
jax: 0.10.0
libtpu: 0.0.40
codegen_flags: <defaults>
</compile_context>

<pallas_src>
import functools

import jax
import jax.numpy as jnp
from jax import lax
from jax.experimental import pallas as pl
from jax.experimental.pallas import tpu as pltpu

NEG_SLOPE = 0.01  # nn.LeakyReLU default


def _leaky_relu(x):
    # max(x, a*x) == leaky_relu(x) for 0 < a < 1 (one fewer VALU op than where).
    return jnp.maximum(x, NEG_SLOPE * x)


def _round_up(n, m):
    return ((n + m - 1) // m) * m


def _cdiv(a, b):
    return -(-a // b)


def _fn_s_t_kernel(xm_ref, w1_ref, b1_ref, w2_ref, b2_ref, w3_ref, b3_ref,
                   out_ref, *, cin):
    # xm: merged [x | mask] block, f32, shape (tm, 2*cin).
    xm = xm_ref[...].astype(jnp.float32)
    xb = xm[:, :cin].astype(jnp.bfloat16)
    one_minus_mask = 1.0 - xm[:, cin:]

    # Linear 1 + LeakyReLU (bf16 MXU operands, f32 accumulation / epilogue).
    h1 = jnp.dot(xb, w1_ref[...], preferred_element_type=jnp.float32)
    h1 = _leaky_relu(h1 + b1_ref[...])

    # Linear 2 + LeakyReLU.
    h2 = jnp.dot(h1.astype(jnp.bfloat16), w2_ref[...],
                 preferred_element_type=jnp.float32)
    h2 = _leaky_relu(h2 + b2_ref[...])

    # Linear 3: single fused s/t head -> (tm, 2*cin).
    y = jnp.dot(h2.astype(jnp.bfloat16), w3_ref[...],
                preferred_element_type=jnp.float32) + b3_ref[...]

    # Mask both halves, tanh only the s-half via an in-vreg lane select.
    omm2 = jnp.concatenate([one_minus_mask, one_minus_mask], axis=-1)
    st = y * omm2
    lane = lax.broadcasted_iota(jnp.int32, st.shape, 1)
    out_ref[...] = jnp.where(lane < cin, jnp.tanh(st), st).astype(out_ref.dtype)


@functools.partial(jax.jit, static_argnames=("tm_max",))
def function_s_t(x, mask, params, *, tm_max=2048):
    """x: (B, Cin), mask: (B, Cin) numeric 0/1 -> (s, t), each (B, Cin) f32."""
    B, Cin = x.shape
    w1, b1, w2, b2, w3, b3 = params
    CH = w1.shape[1]
    C2 = 2 * Cin

    # bf16 MXU weights at the call boundary; biases stay f32.
    w1b = w1.astype(jnp.bfloat16)
    w2b = w2.astype(jnp.bfloat16)
    w3b = w3.astype(jnp.bfloat16)

    # Merge x and mask into one (B, 2*Cin) input stream (halves lane-sparse DMAs).
    xm = jnp.concatenate([x.astype(jnp.float32), mask.astype(jnp.float32)],
                         axis=1)

    # Tiling: big tiles (amortize ~0.35us/step overhead), tiles ~divide B
    # (avoid pathological padding), and >= 2 tiles when B > 8 so the
    # "parallel" batch axis shards across both TensorCores on v7x.
    n_tiles = max(1, _cdiv(B, tm_max))
    if B > 8:
        n_tiles = max(n_tiles, 2)
    tm = _round_up(_cdiv(B, n_tiles), 8)
    Bp = n_tiles * tm
    if Bp != B:
        xm = jnp.pad(xm, ((0, Bp - B), (0, 0)))
    grid = (n_tiles,)

    act_spec = pl.BlockSpec((tm, C2), lambda i: (i, 0))
    # Constant-index weights/biases: single-buffered (they never change block).
    resident = pl.Buffered(1)
    w1_spec = pl.BlockSpec((Cin, CH), lambda i: (0, 0), pipeline_mode=resident)
    b12_spec = pl.BlockSpec((1, CH), lambda i: (0, 0), pipeline_mode=resident)
    w2_spec = pl.BlockSpec((CH, CH), lambda i: (0, 0), pipeline_mode=resident)
    w3_spec = pl.BlockSpec((CH, C2), lambda i: (0, 0), pipeline_mode=resident)
    b3_spec = pl.BlockSpec((1, C2), lambda i: (0, 0), pipeline_mode=resident)

    flops = 2 * Bp * (Cin * CH + CH * CH + CH * C2)
    transcendentals = Bp * Cin  # tanh (s-half)
    bytes_accessed = (
        2 * Bp * C2 * 4                           # merged input + merged output
        + 2 * (Cin * CH + CH * CH + CH * C2)      # bf16 weights
        + 4 * (CH + CH + C2))                     # f32 biases

    out = pl.pallas_call(
        functools.partial(_fn_s_t_kernel, cin=Cin),
        out_shape=jax.ShapeDtypeStruct((Bp, C2), jnp.float32),
        grid=grid,
        in_specs=[act_spec, w1_spec, b12_spec, w2_spec, b12_spec,
                  w3_spec, b3_spec],
        out_specs=act_spec,
        compiler_params=pltpu.CompilerParams(
            dimension_semantics=("parallel",),
            vmem_limit_bytes=32 * 1024 * 1024),
        cost_estimate=pl.CostEstimate(
            flops=flops,
            transcendentals=transcendentals,
            bytes_accessed=bytes_accessed),
    )(xm, w1b, b1, w2b, b2, w3b, b3)

    # TODO(synk): if the consumer accepts a packed (B, 2*Cin) output, return
    # `out[:B]` directly to keep the store lane-dense end-to-end.
    s = out[:B, :Cin]
    t = out[:B, Cin:]
    return s, t


def init_params(key, input_channel, channel=256):
    """Deterministic init mimicking nn.Linear's uniform(-1/sqrt(fan_in), ...)."""
    ks = jax.random.split(key, 6)

    def linear(kw, kb, fan_in, fan_out):
        bound = 1.0 / jnp.sqrt(fan_in)
        w = jax.random.uniform(kw, (fan_in, fan_out), jnp.float32, -bound, bound)
        b = jax.random.uniform(kb, (1, fan_out), jnp.float32, -bound, bound)
        return w, b

    w1, b1 = linear(ks[0], ks[1], input_channel, channel)
    w2, b2 = linear(ks[2], ks[3], channel, channel)
    w3, b3 = linear(ks[4], ks[5], channel, input_channel * 2)
    return (w1, b1, w2, b2, w3, b3)


def reference(x, mask, params):
    """Pure-JAX reference matching the PyTorch forward (bf16 MXU emulation)."""
    w1, b1, w2, b2, w3, b3 = params
    Cin = x.shape[1]
    bf = lambda a: a.astype(jnp.bfloat16)
    h = _leaky_relu(jnp.dot(bf(x), bf(w1), preferred_element_type=jnp.float32) + b1)
    h = _leaky_relu(jnp.dot(bf(h), bf(w2), preferred_element_type=jnp.float32) + b2)
    y = jnp.dot(bf(h), bf(w3), preferred_element_type=jnp.float32) + b3
    one_minus_mask = 1.0 - mask
    s = jnp.tanh(y[:, :Cin] * one_minus_mask)
    t = y[:, Cin:] * one_minus_mask
    return s, t


if __name__ == "__main__":
    key = jax.random.PRNGKey(0)
    k_x, k_m, k_p = jax.random.split(key, 3)

    B, Cin, CH = 8, 16, 256
    x = jax.random.normal(k_x, (B, Cin), jnp.float32)
    # Binary checkerboard-style mask like in coupling layers (numeric 0/1 f32).
    mask = (jax.random.uniform(k_m, (B, Cin)) > 0.5).astype(jnp.float32)

    params = init_params(k_p, Cin, CH)

    s, t = function_s_t(x, mask, params)
    s, t = jax.block_until_ready((s, t))

    s_ref, t_ref = reference(x, mask, params)
    assert s.shape == (B, Cin) and t.shape == (B, Cin)
    assert jnp.allclose(s, s_ref, atol=1e-2, rtol=1e-2), "s mismatch"
    assert jnp.allclose(t, t_ref, atol=1e-2, rtol=1e-2), "t mismatch"

    print("KERNEL_OK")
</pallas_src>

<mosaic_0001>
module attributes {stable_mosaic.version = 11 : i64} {
  func.func @_fn_s_t_kernel(%arg0: i32, %arg1: memref<8x32xf32, #tpu.memory_space<vmem>>, %arg2: memref<16x256xbf16, #tpu.memory_space<vmem>>, %arg3: memref<1x256xf32, #tpu.memory_space<vmem>>, %arg4: memref<256x256xbf16, #tpu.memory_space<vmem>>, %arg5: memref<1x256xf32, #tpu.memory_space<vmem>>, %arg6: memref<256x32xbf16, #tpu.memory_space<vmem>>, %arg7: memref<1x32xf32, #tpu.memory_space<vmem>>, %arg8: memref<8x32xf32, #tpu.memory_space<vmem>>) attributes {dimension_semantics = [#tpu.dimension_semantics<parallel>], iteration_bounds = array<i64: 1>, scalar_prefetch = 0 : i64, scratch_operands = 0 : i64, tpu.core_type = #tpu.core_type<tc>, window_params = [{transform_indices = @transform_0, window_bounds = array<i64: 8, 32>}, {pipeline_mode = #tpu.pipeline_mode<synchronous>, transform_indices = @transform_1, window_bounds = array<i64: 16, 256>}, {pipeline_mode = #tpu.pipeline_mode<synchronous>, transform_indices = @transform_2, window_bounds = array<i64: 1, 256>}, {pipeline_mode = #tpu.pipeline_mode<synchronous>, transform_indices = @transform_3, window_bounds = array<i64: 256, 256>}, {pipeline_mode = #tpu.pipeline_mode<synchronous>, transform_indices = @transform_4, window_bounds = array<i64: 1, 256>}, {pipeline_mode = #tpu.pipeline_mode<synchronous>, transform_indices = @transform_5, window_bounds = array<i64: 256, 32>}, {pipeline_mode = #tpu.pipeline_mode<synchronous>, transform_indices = @transform_6, window_bounds = array<i64: 1, 32>}, {transform_indices = @transform_7, window_bounds = array<i64: 8, 32>}]} {
    %c0 = arith.constant 0 : index
    %c0_0 = arith.constant 0 : index
    %0 = vector.load %arg1[%c0, %c0_0] : memref<8x32xf32, #tpu.memory_space<vmem>>, vector<8x32xf32>
    %1 = vector.extract_strided_slice %0 {offsets = [0, 0], sizes = [8, 16], strides = [1, 1]} : vector<8x32xf32> to vector<8x16xf32>
    %2 = arith.truncf %1 : vector<8x16xf32> to vector<8x16xbf16>
    %3 = vector.extract_strided_slice %0 {offsets = [0, 16], sizes = [8, 16], strides = [1, 1]} : vector<8x32xf32> to vector<8x16xf32>
    %cst = arith.constant 1.000000e+00 : f32
    %4 = vector.broadcast %cst : f32 to vector<8x16xf32>
    %5 = arith.subf %4, %3 : vector<8x16xf32>
    %c0_1 = arith.constant 0 : index
    %c0_2 = arith.constant 0 : index
    %6 = vector.load %arg2[%c0_1, %c0_2] : memref<16x256xbf16, #tpu.memory_space<vmem>>, vector<16x256xbf16>
    %cst_3 = arith.constant dense<0.000000e+00> : vector<8x256xf32>
    %7 = tpu.matmul %2, %6, %cst_3 {dimension_numbers = #tpu.dot_dimension_numbers<[1], [0], [0], [1], [0, 0, 1, 1], [], []>} : vector<8x16xbf16>, vector<16x256xbf16>, vector<8x256xf32> -> vector<8x256xf32>
    %c0_4 = arith.constant 0 : index
    %c0_5 = arith.constant 0 : index
    %8 = vector.load %arg3[%c0_4, %c0_5] : memref<1x256xf32, #tpu.memory_space<vmem>>, vector<1x256xf32>
    %9 = vector.broadcast %8 : vector<1x256xf32> to vector<8x256xf32>
    %10 = arith.addf %7, %9 : vector<8x256xf32>
    %cst_6 = arith.constant 0.00999999977 : f32
    %11 = vector.broadcast %cst_6 : f32 to vector<8x256xf32>
    %12 = arith.mulf %11, %10 : vector<8x256xf32>
    %13 = arith.maximumf %10, %12 : vector<8x256xf32>
    %14 = arith.truncf %13 : vector<8x256xf32> to vector<8x256xbf16>
    %c0_7 = arith.constant 0 : index
    %c0_8 = arith.constant 0 : index
    %15 = vector.load %arg4[%c0_7, %c0_8] : memref<256x256xbf16, #tpu.memory_space<vmem>>, vector<256x256xbf16>
    %cst_9 = arith.constant dense<0.000000e+00> : vector<8x256xf32>
    %16 = tpu.matmul %14, %15, %cst_9 {dimension_numbers = #tpu.dot_dimension_numbers<[1], [0], [0], [1], [0, 0, 1, 1], [], []>} : vector<8x256xbf16>, vector<256x256xbf16>, vector<8x256xf32> -> vector<8x256xf32>
    %c0_10 = arith.constant 0 : index
    %c0_11 = arith.constant 0 : index
    %17 = vector.load %arg5[%c0_10, %c0_11] : memref<1x256xf32, #tpu.memory_space<vmem>>, vector<1x256xf32>
    %18 = vector.broadcast %17 : vector<1x256xf32> to vector<8x256xf32>
    %19 = arith.addf %16, %18 : vector<8x256xf32>
    %cst_12 = arith.constant 0.00999999977 : f32
    %20 = vector.broadcast %cst_12 : f32 to vector<8x256xf32>
    %21 = arith.mulf %20, %19 : vector<8x256xf32>
    %22 = arith.maximumf %19, %21 : vector<8x256xf32>
    %23 = arith.truncf %22 : vector<8x256xf32> to vector<8x256xbf16>
    %c0_13 = arith.constant 0 : index
    %c0_14 = arith.constant 0 : index
    %24 = vector.load %arg6[%c0_13, %c0_14] : memref<256x32xbf16, #tpu.memory_space<vmem>>, vector<256x32xbf16>
    %cst_15 = arith.constant dense<0.000000e+00> : vector<8x32xf32>
    %25 = tpu.matmul %23, %24, %cst_15 {dimension_numbers = #tpu.dot_dimension_numbers<[1], [0], [0], [1], [0, 0, 1, 1], [], []>} : vector<8x256xbf16>, vector<256x32xbf16>, vector<8x32xf32> -> vector<8x32xf32>
    %c0_16 = arith.constant 0 : index
    %c0_17 = arith.constant 0 : index
    %26 = vector.load %arg7[%c0_16, %c0_17] : memref<1x32xf32, #tpu.memory_space<vmem>>, vector<1x32xf32>
    %27 = vector.broadcast %26 : vector<1x32xf32> to vector<8x32xf32>
    %28 = arith.addf %25, %27 : vector<8x32xf32>
    %29 = tpu.concatenate %5, %5 in 1 : vector<8x16xf32>, vector<8x16xf32> -> vector<8x32xf32>
    %30 = arith.mulf %28, %29 : vector<8x32xf32>
    %31 = tpu.iota {dimensions = array<i32: 1>} : vector<8x32xi32>
    %c16_i32 = arith.constant 16 : i32
    %32 = vector.broadcast %c16_i32 : i32 to vector<8x32xi32>
    %33 = arith.cmpi slt, %31, %32 : vector<8x32xi32>
    %34 = math.tanh %30 : vector<8x32xf32>
    %35 = arith.select %33, %34, %30 : vector<8x32xi1>, vector<8x32xf32>
    %c0_18 = arith.constant 0 : index
    %c0_19 = arith.constant 0 : index
    %36 = vector.load %arg8[%c0_18, %c0_19] : memref<8x32xf32, #tpu.memory_space<vmem>>, vector<8x32xf32>
    tpu.vector_store %arg8[%c0_18, %c0_19], %35 {strides = array<i32>} : memref<8x32xf32, #tpu.memory_space<vmem>>, vector<8x32xf32>,
    return
  }
  func.func @transform_0(%arg0: i32) -> (i32, i32) {
    %c0_i32 = arith.constant 0 : i32
    %c0_i32_0 = arith.constant 0 : i32
    return %arg0, %c0_i32 : i32, i32
  }
  func.func @transform_1(%arg0: i32) -> (i32, i32) {
    %c0_i32 = arith.constant 0 : i32
    %c0_i32_0 = arith.constant 0 : i32
    %c0_i32_1 = arith.constant 0 : i32
    return %c0_i32, %c0_i32_0 : i32, i32
  }
  func.func @transform_2(%arg0: i32) -> (i32, i32) {
    %c0_i32 = arith.constant 0 : i32
    %c0_i32_0 = arith.constant 0 : i32
    %c0_i32_1 = arith.constant 0 : i32
    return %c0_i32, %c0_i32_0 : i32, i32
  }
  func.func @transform_3(%arg0: i32) -> (i32, i32) {
    %c0_i32 = arith.constant 0 : i32
    %c0_i32_0 = arith.constant 0 : i32
    %c0_i32_1 = arith.constant 0 : i32
    return %c0_i32, %c0_i32_0 : i32, i32
  }
  func.func @transform_4(%arg0: i32) -> (i32, i32) {
    %c0_i32 = arith.constant 0 : i32
    %c0_i32_0 = arith.constant 0 : i32
    %c0_i32_1 = arith.constant 0 : i32
    return %c0_i32, %c0_i32_0 : i32, i32
  }
  func.func @transform_5(%arg0: i32) -> (i32, i32) {
    %c0_i32 = arith.constant 0 : i32
    %c0_i32_0 = arith.constant 0 : i32
    %c0_i32_1 = arith.constant 0 : i32
    return %c0_i32, %c0_i32_0 : i32, i32
  }
  func.func @transform_6(%arg0: i32) -> (i32, i32) {
    %c0_i32 = arith.constant 0 : i32
    %c0_i32_0 = arith.constant 0 : i32
    %c0_i32_1 = arith.constant 0 : i32
    return %c0_i32, %c0_i32_0 : i32, i32
  }
  func.func @transform_7(%arg0: i32) -> (i32, i32) {
    %c0_i32 = arith.constant 0 : i32
    %c0_i32_0 = arith.constant 0 : i32
    return %arg0, %c0_i32 : i32, i32
  }
}

</mosaic_0001>

<llo_original>
// kernel: function_s_t.1
$region0: #{function_s_t.1}
  #allocation0 [shape = 'u32[]', space=smem, size = 0x4, offset = 0x4, fixed_abs, tag = 'smem constant byte address 0x4 - core index']
  #allocation1 [shape = 'u32[144,128]{1,0:T(1,128)}', space=vmem, size = 0x12000, scoped, tag = 'internal scratch']
  %s0 = inlined_call_operand.vmem [shape: f32[8,32], index: 0, kind: input, shape index: {}]
  %s1 = inlined_call_operand.vmem [shape: bf16[16,256], index: 1, kind: input, shape index: {}]
  %s2 = inlined_call_operand.vmem [shape: f32[1,256], index: 2, kind: input, shape index: {}]
  %s3 = inlined_call_operand.vmem [shape: bf16[256,256], index: 3, kind: input, shape index: {}]
  %s4 = inlined_call_operand.vmem [shape: f32[1,256], index: 4, kind: input, shape index: {}]
  %s5 = inlined_call_operand.vmem [shape: bf16[256,32], index: 5, kind: input, shape index: {}]
  %s6 = inlined_call_operand.vmem [shape: f32[1,32], index: 6, kind: input, shape index: {}]
  %s7 = inlined_call_operand.vmem [shape: f32[8,32], index: 7, kind: output, shape index: {}]
  %s8 = sld [smem:[#allocation0]]
  $region38: #{function_s_t.1} parent=0
    _
  %s10 = ssub.s32 1, %s8
  %s11 = scalar_select 0, %s10, %s8
  // Predicated region
  $region2: #{function_s_t.1} parent=0 // pred_check
    _
  $region3: #{function_s_t.1} parent=0 // pred_check_branch
    %13 = sbr.rel (0) target = $region5
  $region4: #{function_s_t.1} parent=0 // pred_region
    _
  $region5: #{function_s_t.1} parent=0 // pred_fallthru
    _
  // Predicated region
  $region6: #{function_s_t.1} parent=0 // pred_check
    _
  $region7: #{function_s_t.1} parent=0 // pred_check_branch
    %15 = sbr.rel (0) target = $region9
  $region8: #{function_s_t.1} parent=0 // pred_region
    _
  $region9: #{function_s_t.1} parent=0 // pred_fallthru
    _
  // Predicated region
  $region10: #{function_s_t.1} parent=0 // pred_check
    _
  $region11: #{function_s_t.1} parent=0 // pred_check_branch
    %17 = sbr.rel (0) target = $region13
  $region12: #{function_s_t.1} parent=0 // pred_region
    _
  $region13: #{function_s_t.1} parent=0 // pred_fallthru
    _
  // Predicated region
  $region14: #{function_s_t.1} parent=0 // pred_check
    _
  $region15: #{function_s_t.1} parent=0 // pred_check_branch
    %19 = sbr.rel (0) target = $region17
  $region16: #{function_s_t.1} parent=0 // pred_region
    _
  $region17: #{function_s_t.1} parent=0 // pred_fallthru
    _
  // Predicated region
  $region18: #{function_s_t.1} parent=0 // pred_check
    _
  $region19: #{function_s_t.1} parent=0 // pred_check_branch
    %21 = sbr.rel (0) target = $region21
  $region20: #{function_s_t.1} parent=0 // pred_region
    _
  $region21: #{function_s_t.1} parent=0 // pred_fallthru
    _
  // Predicated region
  $region22: #{function_s_t.1} parent=0 // pred_check
    _
  $region23: #{function_s_t.1} parent=0 // pred_check_branch
    %23 = sbr.rel (0) target = $region25
  $region24: #{function_s_t.1} parent=0 // pred_region
    _
  $region25: #{function_s_t.1} parent=0 // pred_fallthru
    _
  // Predicated region
  $region26: #{function_s_t.1} parent=0 // pred_check
    _
  $region27: #{function_s_t.1} parent=0 // pred_check_branch
    %25 = sbr.rel (0) target = $region29
  $region28: #{function_s_t.1} parent=0 // pred_region
    _
  $region29: #{function_s_t.1} parent=0 // pred_fallthru
    _
  %v27 = vld [vmem:[%s0] sm:$0xff]
  %v28 = vpack.c.bf16 %v27, %v27
  %v29 = vsub.f32 1.0, %v27
  %v30 = vld [vmem:[%s1] sm:$0xff]
  %v31 = vld [vmem:[%s1 + $0x8] sm:$0xff]
  %v32 = vld [vmem:[%s2] sm:$0x3]
  %v34 = vlaneseq
  %v35 = vshrl.u32 %v34, 7
  %v36 = vsub.s32 0, %v35
  %v37 = vrot.slane %v32, %v36
  %v38 = vlaneseq
  %v39 = vshrl.u32 %v38, 7
  %v40 = vsub.s32 1, %v39
  %v41 = vrot.slane %v32, %v40
  %v46 = vunpack.c.l.b16 %v30
  %v47 = vunpack.c.h.b16 %v30
  %v48 = vunpack.c.l.b16 %v31
  %v49 = vunpack.c.h.b16 %v31
  %v50 = vpack.c.b16 %v48, %v46
  %v51 = vpack.c.b16 %v49, %v47
  %vm54 = vcmask 130048
  %v56 = vsel %vm54, %v28, 0
  %58 = vmatprep.subr.bf16.mxu0 0
  %59 = vmatpush1.bf16.msra.mxu0 0
  %60 = vmatprep.subr.bf16.mxu0 0
  %61 = vmatpush1.bf16.msra.mxu0 0
  %62 = vmatprep.subr.bf16.mxu0 0
  %63 = vmatpush1.bf16.msra.mxu0 0
  %64 = vmatprep.subr.bf16.mxu0 0
  %65 = vmatpush1.bf16.msra.mxu0 0
  %66 = vmatprep.subr.bf16.mxu0 0
  %67 = vmatpush1.bf16.msra.mxu0 0
  %68 = vmatprep.subr.bf16.mxu0 0
  %69 = vmatpush1.bf16.msra.mxu0 0
  %70 = vmatprep.subr.bf16.mxu0 0
  %71 = vmatpush1.bf16.msra.mxu0 0
  %72 = vmatprep.subr.bf16.mxu0 %v51
  %73 = vmatpush1.bf16.msra.mxu0 %v50
  %74 = vmatprep.subr.bf16.mxu0 0
  %75 = vmatpush2.bf16.msra.mxu0 0
  %76 = vmatprep.subr.bf16.mxu0 0
  %77 = vmatpush2.bf16.msra.mxu0 0
  %78 = vmatprep.subr.bf16.mxu0 0
  %79 = vmatpush2.bf16.msra.mxu0 0
  %80 = vmatprep.subr.bf16.mxu0 0
  %81 = vmatpush2.bf16.msra.mxu0 0
  %82 = vmatprep.subr.bf16.mxu0 0
  %83 = vmatpush2.bf16.msra.mxu0 0
  %84 = vmatprep.subr.bf16.mxu0 0
  %85 = vmatpush2.bf16.msra.mxu0 0
  %86 = vmatprep.subr.bf16.mxu0 0
  %87 = vmatpush2.bf16.msra.mxu0 0
  %88 = vmatprep.subr.bf16.mxu0 0
  %89 = vmatpush2.bf16.msra.mxu0 0
  %90 = vmatprep.mubr.bf16.mxu0 0
  %91 = vmatmul.mubr.bf16.gmra.mxu0 %v56
  %v92 = vpop.f32.mrf.mxu0
  %v93 = vadd.f32 %v37, %v92
  %v94 = vpop.f32.mrf.mxu0
  %v95 = vadd.f32 %v41, %v94
  %v96 = vpop.f32.mrf.mxu0
  %v97 = vpop.f32.mrf.mxu0
  %98 = vdwg.mxu0
  %v99 = vmul.f32 %v93, 0.01
  %v100 = vmul.f32 %v95, 0.01
  %v101 = vmax.f32 %v93, %v99
  %v102 = vmax.f32 %v95, %v100
  %v103 = vpack.c.bf16 %v101, %v101
  %v104 = vpack.c.bf16 %v102, %v102
  %v105 = vld [vmem:[%s3] sm:$0xff]
  %v106 = vld [vmem:[%s3 + $0x8] sm:$0xff]
  %v107 = vld [vmem:[%s3 + $0x10] sm:$0xff]
  %v108 = vld [vmem:[%s3 + $0x18] sm:$0xff]
  %v109 = vld [vmem:[%s3 + $0x20] sm:$0xff]
  %v110 = vld [vmem:[%s3 + $0x28] sm:$0xff]
  %v111 = vld [vmem:[%s3 + $0x30] sm:$0xff]
  %v112 = vld [vmem:[%s3 + $0x38] sm:$0xff]
  %v113 = vld [vmem:[%s3 + $0x40] sm:$0xff]
  %v114 = vld [vmem:[%s3 + $0x48] sm:$0xff]
  %v115 = vld [vmem:[%s3 + $0x50] sm:$0xff]
  %v116 = vld [vmem:[%s3 + $0x58] sm:$0xff]
  %v117 = vld [vmem:[%s3 + $0x60] sm:$0xff]
  %v118 = vld [vmem:[%s3 + $0x68] sm:$0xff]
  %v119 = vld [vmem:[%s3 + $0x70] sm:$0xff]
  %v120 = vld [vmem:[%s3 + $0x78] sm:$0xff]
  %v121 = vld [vmem:[%s3 + $0x80] sm:$0xff]
  %v122 = vld [vmem:[%s3 + $0x88] sm:$0xff]
  %v123 = vld [vmem:[%s3 + $0x90] sm:$0xff]
  %v124 = vld [vmem:[%s3 + $0x98] sm:$0xff]
  %v125 = vld [vmem:[%s3 + $0xa0] sm:$0xff]
  %v126 = vld [vmem:[%s3 + $0xa8] sm:$0xff]
  %v127 = vld [vmem:[%s3 + $0xb0] sm:$0xff]
  %v128 = vld [vmem:[%s3 + $0xb8] sm:$0xff]
  %v129 = vld [vmem:[%s3 + $0xc0] sm:$0xff]
  %v130 = vld [vmem:[%s3 + $0xc8] sm:$0xff]
  %v131 = vld [vmem:[%s3 + $0xd0] sm:$0xff]
  %v132 = vld [vmem:[%s3 + $0xd8] sm:$0xff]
  %v133 = vld [vmem:[%s3 + $0xe0] sm:$0xff]
  %v134 = vld [vmem:[%s3 + $0xe8] sm:$0xff]
  %v135 = vld [vmem:[%s3 + $0xf0] sm:$0xff]
  %v136 = vld [vmem:[%s3 + $0xf8] sm:$0xff]
  %v137 = vld [vmem:[%s4] sm:$0x3]
  %v139 = vlaneseq
  %v140 = vshrl.u32 %v139, 7
  %v141 = vsub.s32 0, %v140
  %v142 = vrot.slane %v137, %v141
  %v143 = vlaneseq
  %v144 = vshrl.u32 %v143, 7
  %v145 = vsub.s32 1, %v144
  %v146 = vrot.slane %v137, %v145
  %v181 = vunpack.c.l.b16 %v105
  %v182 = vunpack.c.h.b16 %v105
  %v183 = vunpack.c.l.b16 %v106
  %v184 = vunpack.c.h.b16 %v106
  %v185 = vunpack.c.l.b16 %v107
  %v186 = vunpack.c.h.b16 %v107
  %v187 = vunpack.c.l.b16 %v108
  %v188 = vunpack.c.h.b16 %v108
  %v189 = vunpack.c.l.b16 %v109
  %v190 = vunpack.c.h.b16 %v109
  %v191 = vunpack.c.l.b16 %v110
  %v192 = vunpack.c.h.b16 %v110
  %v193 = vunpack.c.l.b16 %v111
  %v194 = vunpack.c.h.b16 %v111
  %v195 = vunpack.c.l.b16 %v112
  %v196 = vunpack.c.h.b16 %v112
  %v197 = vunpack.c.l.b16 %v113
  %v198 = vunpack.c.h.b16 %v113
  %v199 = vunpack.c.l.b16 %v114
  %v200 = vunpack.c.h.b16 %v114
  %v201 = vunpack.c.l.b16 %v115
  %v202 = vunpack.c.h.b16 %v115
  %v203 = vunpack.c.l.b16 %v116
  %v204 = vunpack.c.h.b16 %v116
  %v205 = vunpack.c.l.b16 %v117
  %v206 = vunpack.c.h.b16 %v117
  %v207 = vunpack.c.l.b16 %v118
  %v208 = vunpack.c.h.b16 %v118
  %v209 = vunpack.c.l.b16 %v119
  %v210 = vunpack.c.h.b16 %v119
  %v211 = vunpack.c.l.b16 %v120
  %v212 = vunpack.c.h.b16 %v120
  %v213 = vunpack.c.l.b16 %v121
  %v214 = vunpack.c.h.b16 %v121
  %v215 = vunpack.c.l.b16 %v122
  %v216 = vunpack.c.h.b16 %v122
  %v217 = vunpack.c.l.b16 %v123
  %v218 = vunpack.c.h.b16 %v123
  %v219 = vunpack.c.l.b16 %v124
  %v220 = vunpack.c.h.b16 %v124
  %v221 = vunpack.c.l.b16 %v125
  %v222 = vunpack.c.h.b16 %v125
  %v223 = vunpack.c.l.b16 %v126
  %v224 = vunpack.c.h.b16 %v126
  %v225 = vunpack.c.l.b16 %v127
  %v226 = vunpack.c.h.b16 %v127
  %v227 = vunpack.c.l.b16 %v128
  %v228 = vunpack.c.h.b16 %v128
  %v229 = vunpack.c.l.b16 %v129
  %v230 = vunpack.c.h.b16 %v129
  %v231 = vunpack.c.l.b16 %v130
  %v232 = vunpack.c.h.b16 %v130
  %v233 = vunpack.c.l.b16 %v131
  %v234 = vunpack.c.h.b16 %v131
  %v235 = vunpack.c.l.b16 %v132
  %v236 = vunpack.c.h.b16 %v132
  %v237 = vunpack.c.l.b16 %v133
  %v238 = vunpack.c.h.b16 %v133
  %v239 = vunpack.c.l.b16 %v134
  %v240 = vunpack.c.h.b16 %v134
  %v241 = vunpack.c.l.b16 %v135
  %v242 = vunpack.c.h.b16 %v135
  %v243 = vunpack.c.l.b16 %v136
  %v244 = vunpack.c.h.b16 %v136
  %v245 = vpack.c.b16 %v183, %v181
  %v246 = vpack.c.b16 %v184, %v182
  %v247 = vpack.c.b16 %v187, %v185
  %v248 = vpack.c.b16 %v188, %v186
  %v249 = vpack.c.b16 %v191, %v189
  %v250 = vpack.c.b16 %v192, %v190
  %v251 = vpack.c.b16 %v195, %v193
  %v252 = vpack.c.b16 %v196, %v194
  %v253 = vpack.c.b16 %v199, %v197
  %v254 = vpack.c.b16 %v200, %v198
  %v255 = vpack.c.b16 %v203, %v201
  %v256 = vpack.c.b16 %v204, %v202
  %v257 = vpack.c.b16 %v207, %v205
  %v258 = vpack.c.b16 %v208, %v206
  %v259 = vpack.c.b16 %v211, %v209
  %v260 = vpack.c.b16 %v212, %v210
  %v261 = vpack.c.b16 %v215, %v213
  %v262 = vpack.c.b16 %v216, %v214
  %v263 = vpack.c.b16 %v219, %v217
  %v264 = vpack.c.b16 %v220, %v218
  %v265 = vpack.c.b16 %v223, %v221
  %v266 = vpack.c.b16 %v224, %v222
  %v267 = vpack.c.b16 %v227, %v225
  %v268 = vpack.c.b16 %v228, %v226
  %v269 = vpack.c.b16 %v231, %v229
  %v270 = vpack.c.b16 %v232, %v230
  %v271 = vpack.c.b16 %v235, %v233
  %v272 = vpack.c.b16 %v236, %v234
  %v273 = vpack.c.b16 %v239, %v237
  %v274 = vpack.c.b16 %v240, %v238
  %v275 = vpack.c.b16 %v243, %v241
  %v276 = vpack.c.b16 %v244, %v242
  %309 = vmatprep.subr.bf16.mxu0 %v260
  %310 = vmatpush1.bf16.msra.mxu0 %v259
  %311 = vmatprep.subr.bf16.mxu0 %v258
  %312 = vmatpush1.bf16.msra.mxu0 %v257
  %313 = vmatprep.subr.bf16.mxu0 %v256
  %314 = vmatpush1.bf16.msra.mxu0 %v255
  %315 = vmatprep.subr.bf16.mxu0 %v254
  %316 = vmatpush1.bf16.msra.mxu0 %v253
  %317 = vmatprep.subr.bf16.mxu0 %v252
  %318 = vmatpush1.bf16.msra.mxu0 %v251
  %319 = vmatprep.subr.bf16.mxu0 %v250
  %320 = vmatpush1.bf16.msra.mxu0 %v249
  %321 = vmatprep.subr.bf16.mxu0 %v248
  %322 = vmatpush1.bf16.msra.mxu0 %v247
  %323 = vmatprep.subr.bf16.mxu0 %v246
  %324 = vmatpush1.bf16.msra.mxu0 %v245
  %325 = vmatprep.subr.bf16.mxu0 %v276
  %326 = vmatpush2.bf16.msra.mxu0 %v275
  %327 = vmatprep.subr.bf16.mxu0 %v274
  %328 = vmatpush2.bf16.msra.mxu0 %v273
  %329 = vmatprep.subr.bf16.mxu0 %v272
  %330 = vmatpush2.bf16.msra.mxu0 %v271
  %331 = vmatprep.subr.bf16.mxu0 %v270
  %332 = vmatpush2.bf16.msra.mxu0 %v269
  %333 = vmatprep.subr.bf16.mxu0 %v268
  %334 = vmatpush2.bf16.msra.mxu0 %v267
  %335 = vmatprep.subr.bf16.mxu0 %v266
  %336 = vmatpush2.bf16.msra.mxu0 %v265
  %337 = vmatprep.subr.bf16.mxu0 %v264
  %338 = vmatpush2.bf16.msra.mxu0 %v263
  %339 = vmatprep.subr.bf16.mxu0 %v262
  %340 = vmatpush2.bf16.msra.mxu0 %v261
  %341 = vmatprep.mubr.bf16.mxu0 %v104
  %342 = vmatmul.mubr.bf16.gmra.mxu0 %v103
  %v343 = vpop.f32.mrf.mxu0
  %v344 = vadd.f32 %v142, %v343
  %v345 = vpop.f32.mrf.mxu0
  %v346 = vadd.f32 %v146, %v345
  %v347 = vpop.f32.mrf.mxu0
  %v348 = vpop.f32.mrf.mxu0
  %349 = vdwg.mxu0
  %v350 = vmul.f32 %v344, 0.01
  %v351 = vmul.f32 %v346, 0.01
  %v352 = vmax.f32 %v344, %v350
  %v353 = vmax.f32 %v346, %v351
  %v354 = vpack.c.bf16 %v352, %v352
  %v355 = vpack.c.bf16 %v353, %v353
  %v356 = vld [vmem:[%s5] sm:$0xf]
  %v357 = vld [vmem:[%s5 + $0x4] sm:$0xf]
  %v358 = vld [vmem:[%s5 + $0x8] sm:$0xf]
  %v359 = vld [vmem:[%s5 + $0xc] sm:$0xf]
  %v360 = vld [vmem:[%s5 + $0x10] sm:$0xf]
  %v361 = vld [vmem:[%s5 + $0x14] sm:$0xf]
  %v362 = vld [vmem:[%s5 + $0x18] sm:$0xf]
  %v363 = vld [vmem:[%s5 + $0x1c] sm:$0xf]
  %v364 = vld [vmem:[%s5 + $0x20] sm:$0xf]
  %v365 = vld [vmem:[%s5 + $0x24] sm:$0xf]
  %v366 = vld [vmem:[%s5 + $0x28] sm:$0xf]
  %v367 = vld [vmem:[%s5 + $0x2c] sm:$0xf]
  %v368 = vld [vmem:[%s5 + $0x30] sm:$0xf]
  %v369 = vld [vmem:[%s5 + $0x34] sm:$0xf]
  %v370 = vld [vmem:[%s5 + $0x38] sm:$0xf]
  %v371 = vld [vmem:[%s5 + $0x3c] sm:$0xf]
  %v372 = vld [vmem:[%s5 + $0x40] sm:$0xf]
  %v373 = vld [vmem:[%s5 + $0x44] sm:$0xf]
  %v374 = vld [vmem:[%s5 + $0x48] sm:$0xf]
  %v375 = vld [vmem:[%s5 + $0x4c] sm:$0xf]
  %v376 = vld [vmem:[%s5 + $0x50] sm:$0xf]
  %v377 = vld [vmem:[%s5 + $0x54] sm:$0xf]
  %v378 = vld [vmem:[%s5 + $0x58] sm:$0xf]
  %v379 = vld [vmem:[%s5 + $0x5c] sm:$0xf]
  %v380 = vld [vmem:[%s5 + $0x60] sm:$0xf]
  %v381 = vld [vmem:[%s5 + $0x64] sm:$0xf]
  %v382 = vld [vmem:[%s5 + $0x68] sm:$0xf]
  %v383 = vld [vmem:[%s5 + $0x6c] sm:$0xf]
  %v384 = vld [vmem:[%s5 + $0x70] sm:$0xf]
  %v385 = vld [vmem:[%s5 + $0x74] sm:$0xf]
  %v386 = vld [vmem:[%s5 + $0x78] sm:$0xf]
  %v387 = vld [vmem:[%s5 + $0x7c] sm:$0xf]
  %v388 = vld [vmem:[%s6] sm:$0x1]
  %v390 = vlaneseq
  %v391 = vshrl.u32 %v390, 7
  %v392 = vsub.s32 0, %v391
  %v393 = vrot.slane %v388, %v392
  %v427 = vunpack.c.l.b16 %v356
  %v428 = vunpack.c.l.b16 %v357
  %v429 = vunpack.c.l.b16 %v358
  %v430 = vunpack.c.l.b16 %v359
  %v431 = vunpack.c.l.b16 %v360
  %v432 = vunpack.c.l.b16 %v361
  %v433 = vunpack.c.l.b16 %v362
  %v434 = vunpack.c.l.b16 %v363
  %v435 = vunpack.c.l.b16 %v364
  %v436 = vunpack.c.l.b16 %v365
  %v437 = vunpack.c.l.b16 %v366
  %v438 = vunpack.c.l.b16 %v367
  %v439 = vunpack.c.l.b16 %v368
  %v440 = vunpack.c.l.b16 %v369
  %v441 = vunpack.c.l.b16 %v370
  %v442 = vunpack.c.l.b16 %v371
  %v443 = vunpack.c.l.b16 %v372
  %v444 = vunpack.c.l.b16 %v373
  %v445 = vunpack.c.l.b16 %v374
  %v446 = vunpack.c.l.b16 %v375
  %v447 = vunpack.c.l.b16 %v376
  %v448 = vunpack.c.l.b16 %v377
  %v449 = vunpack.c.l.b16 %v378
  %v450 = vunpack.c.l.b16 %v379
  %v451 = vunpack.c.l.b16 %v380
  %v452 = vunpack.c.l.b16 %v381
  %v453 = vunpack.c.l.b16 %v382
  %v454 = vunpack.c.l.b16 %v383
  %v455 = vunpack.c.l.b16 %v384
  %v456 = vunpack.c.l.b16 %v385
  %v457 = vunpack.c.l.b16 %v386
  %v458 = vunpack.c.l.b16 %v387
  %v459 = vpack.c.b16 %v428, %v427
  %v460 = vpack.c.b16 %v430, %v429
  %v461 = vpack.c.b16 %v432, %v431
  %v462 = vpack.c.b16 %v434, %v433
  %v463 = vpack.c.b16 %v436, %v435
  %v464 = vpack.c.b16 %v438, %v437
  %v465 = vpack.c.b16 %v440, %v439
  %v466 = vpack.c.b16 %v442, %v441
  %v467 = vpack.c.b16 %v444, %v443
  %v468 = vpack.c.b16 %v446, %v445
  %v469 = vpack.c.b16 %v448, %v447
  %v470 = vpack.c.b16 %v450, %v449
  %v471 = vpack.c.b16 %v452, %v451
  %v472 = vpack.c.b16 %v454, %v453
  %v473 = vpack.c.b16 %v456, %v455
  %v474 = vpack.c.b16 %v458, %v457
  %491 = vmatprep.subr.bf16.mxu0 0
  %492 = vmatpush1.bf16.msra.mxu0 %v466
  %493 = vmatprep.subr.bf16.mxu0 0
  %494 = vmatpush1.bf16.msra.mxu0 %v465
  %495 = vmatprep.subr.bf16.mxu0 0
  %496 = vmatpush1.bf16.msra.mxu0 %v464
  %497 = vmatprep.subr.bf16.mxu0 0
  %498 = vmatpush1.bf16.msra.mxu0 %v463
  %499 = vmatprep.subr.bf16.mxu0 0
  %500 = vmatpush1.bf16.msra.mxu0 %v462
  %501 = vmatprep.subr.bf16.mxu0 0
  %502 = vmatpush1.bf16.msra.mxu0 %v461
  %503 = vmatprep.subr.bf16.mxu0 0
  %504 = vmatpush1.bf16.msra.mxu0 %v460
  %505 = vmatprep.subr.bf16.mxu0 0
  %506 = vmatpush1.bf16.msra.mxu0 %v459
  %507 = vmatprep.subr.bf16.mxu0 0
  %508 = vmatpush2.bf16.msra.mxu0 %v474
  %509 = vmatprep.subr.bf16.mxu0 0
  %510 = vmatpush2.bf16.msra.mxu0 %v473
  %511 = vmatprep.subr.bf16.mxu0 0
  %512 = vmatpush2.bf16.msra.mxu0 %v472
  %513 = vmatprep.subr.bf16.mxu0 0
  %514 = vmatpush2.bf16.msra.mxu0 %v471
  %515 = vmatprep.subr.bf16.mxu0 0
  %516 = vmatpush2.bf16.msra.mxu0 %v470
  %517 = vmatprep.subr.bf16.mxu0 0
  %518 = vmatpush2.bf16.msra.mxu0 %v469
  %519 = vmatprep.subr.bf16.mxu0 0
  %520 = vmatpush2.bf16.msra.mxu0 %v468
  %521 = vmatprep.subr.bf16.mxu0 0
  %522 = vmatpush2.bf16.msra.mxu0 %v467
  %523 = vmatprep.mubr.bf16.mxu0 %v355
  %524 = vmatmul.mubr.bf16.gmra.mxu0 %v354
  %v525 = vpop.f32.mrf.mxu0
  %v526 = vadd.f32 %v393, %v525
  %v527 = vpop.f32.mrf.mxu0
  %v528 = vpop.f32.mrf.mxu0
  %v529 = vpop.f32.mrf.mxu0
  %530 = vdwg.mxu0
  %532 = vrot.lane.b32.xlu0 %v29, 112
  %v533 = vpop.permute.xlu0 %532
  %v535 = vsel %vm54, %v533, %v29
  %v536 = vmul.f32 %v526, %v535
  %v537 = vlaneseq
  %v538 = vand.u32 %v537, 127
  %vm539 = vcmp.lt.s32.totalorder %v538, 16
  %v540 = vtanh.pop %v536
  %v541 = vsel %vm539, %v540, %v536
  %vm542 = vcmask 261120
  %543 = vst.msk [vmem:[%s7] sm:$0xff] %vm542, %v541
  // Predicated region
  $region30: #{function_s_t.1} parent=0 // pred_check
    _
  $region31: #{function_s_t.1} parent=0 // pred_check_branch
    %545 = sbr.rel (0) target = $region33
  $region32: #{function_s_t.1} parent=0 // pred_region
    _
  $region33: #{function_s_t.1} parent=0 // pred_fallthru
    _
  // Predicated region
  $region34: #{function_s_t.1} parent=0 // pred_check
    _
  $region35: #{function_s_t.1} parent=0 // pred_check_branch
    %547 = sbr.rel (0) target = $region37
  $region36: #{function_s_t.1} parent=0 // pred_region
    _
  $region37: #{function_s_t.1} parent=0 // pred_fallthru
    _

</llo_original>
